<compile_context>
chip_gen: v5e
topology: v5e:2x2
jax: 0.10.0
libtpu: 0.0.40
codegen_flags: <defaults>
</compile_context>

<pallas_src>
import jax
import jax.numpy as jnp
from jax.experimental import pallas as pl
from jax.experimental.pallas import tpu as pltpu

D_IN = 9
HIDDEN = 32


def _pose_encoder_kernel(x_ref, w_ref, b_ref, o_ref):
    """Fused 3-layer MLP in natural (rows, features) layout.

    x_ref : (tn, 9)   input tile (batch rows on sublanes)
    w_ref : (96, 32)  packed transposed weights: rows [0:9]  = W1^T,
                      rows [32:64] = W2^T, rows [64:96] = W3^T (rest zero)
    b_ref : (3, 32)   packed biases, one row per layer
    o_ref : (tn, 32)  output tile
    """
    x = x_ref[...]                      # (tn, 9)

    w1 = w_ref[0:D_IN, :]               # (9, 32)  static slices of the
    w2 = w_ref[32:64, :]                # (32, 32) resident VMEM weight slab
    w3 = w_ref[64:96, :]                # (32, 32)

    h = jnp.dot(x, w1, preferred_element_type=jnp.float32)
    h = jnp.maximum(h + b_ref[0:1, :], 0.0)

    h = jnp.dot(h, w2, preferred_element_type=jnp.float32)
    h = jnp.maximum(h + b_ref[1:2, :], 0.0)

    h = jnp.dot(h, w3, preferred_element_type=jnp.float32)
    h = jnp.maximum(h + b_ref[2:3, :], 0.0)

    o_ref[...] = h.astype(o_ref.dtype)


def _pack_params(params):
    """Pack PyTorch-layout params into one weight slab and one bias slab."""
    w_packed = jnp.zeros((3 * HIDDEN, HIDDEN), jnp.float32)
    w_packed = w_packed.at[0:D_IN, :].set(params["w1"].T.astype(jnp.float32))
    w_packed = w_packed.at[32:64, :].set(params["w2"].T.astype(jnp.float32))
    w_packed = w_packed.at[64:96, :].set(params["w3"].T.astype(jnp.float32))
    b_packed = jnp.stack(
        [params["b1"], params["b2"], params["b3"]], axis=0
    ).astype(jnp.float32).reshape(3, HIDDEN)
    return w_packed, b_packed


def _tensorcores_per_chip():
    """v7x has 2 TensorCores per chip (a 'parallel' grid axis shards across
    them); v5e/v6e have 1, where splitting a fitting batch only adds the
    ~0.35 us/step overhead.  Perf-only heuristic -- default to 1 on doubt."""
    try:
        kind = jax.devices()[0].device_kind.lower()
    except Exception:
        return 1
    return 2 if ("v7" in kind or "7x" in kind) else 1


def pose_encoder(x, params, *, tn=8192):
    """x: (..., 9) float32 -> (..., 32) float32 (Linear+ReLU x3)."""
    orig_shape = x.shape
    assert orig_shape[-1] == D_IN
    x2 = x.reshape(-1, D_IN)
    N = x2.shape[0]
    if N == 0:  # degenerate batch guard
        return jnp.zeros(orig_shape[:-1] + (HIDDEN,), x.dtype)

    w_packed, b_packed = _pack_params(params)

    # Batch tile: big enough to amortize per-step pipeline overhead, small
    # enough that the lane-padded (tn,9)/(tn,32) buffers + intermediates stay
    # inside scoped VMEM (~3.5 KiB/row -> ~28 MiB at tn=8192).
    tn_eff = N if N <= tn else tn       # full-dim block is always legal;
    grid_n = pl.cdiv(N, tn_eff)         # tn (8192) is a multiple of 8

    # v7x only: make sure both TensorCores get work when the batch would
    # otherwise fit in a single grid step.
    ncores = _tensorcores_per_chip()
    if ncores > 1 and grid_n < ncores and N >= 2048:
        tn_eff = max(8, (((N + ncores - 1) // ncores) + 7) // 8 * 8)
        grid_n = pl.cdiv(N, tn_eff)

    out = pl.pallas_call(
        _pose_encoder_kernel,
        out_shape=jax.ShapeDtypeStruct((N, HIDDEN), jnp.float32),
        grid_spec=pltpu.PrefetchScalarGridSpec(
            num_scalar_prefetch=0,
            grid=(grid_n,),
            in_specs=[
                pl.BlockSpec((tn_eff, D_IN), lambda i: (i, 0)),   # x rows
                pl.BlockSpec(w_packed.shape, lambda i: (0, 0)),   # resident W
                pl.BlockSpec(b_packed.shape, lambda i: (0, 0)),   # resident b
            ],
            out_specs=pl.BlockSpec((tn_eff, HIDDEN), lambda i: (i, 0)),
        ),
        compiler_params=pltpu.CompilerParams(
            dimension_semantics=("parallel",),
            vmem_limit_bytes=64 << 20,
        ),
    )(x2, w_packed, b_packed)

    return out.astype(x.dtype).reshape(orig_shape[:-1] + (HIDDEN,))


def init_params(key):
    """Deterministic init matching nn.Linear: weight (out, in), bias (out,)."""
    k1, k2, k3, k4, k5, k6 = jax.random.split(key, 6)

    def linear_init(kw, kb, fan_in, fan_out):
        bound = 1.0 / (fan_in ** 0.5)
        w = jax.random.uniform(kw, (fan_out, fan_in), jnp.float32,
                               minval=-bound, maxval=bound)
        b = jax.random.uniform(kb, (fan_out,), jnp.float32,
                               minval=-bound, maxval=bound)
        return w, b

    w1, b1 = linear_init(k1, k2, 9, 32)
    w2, b2 = linear_init(k3, k4, 32, 32)
    w3, b3 = linear_init(k5, k6, 32, 32)
    return {"w1": w1, "b1": b1, "w2": w2, "b2": b2, "w3": w3, "b3": b3}


def pose_encoder_ref(x, params):
    h = jnp.maximum(x @ params["w1"].T + params["b1"], 0.0)
    h = jnp.maximum(h @ params["w2"].T + params["b2"], 0.0)
    h = jnp.maximum(h @ params["w3"].T + params["b3"], 0.0)
    return h


if __name__ == "__main__":
    key = jax.random.PRNGKey(0)
    kp, kx = jax.random.split(key)

    params = init_params(kp)
    # batch of 16 pose vectors, each of dim 9 (e.g. flattened 3x3 rotation)
    x = jax.random.normal(kx, (16, 9), jnp.float32)

    out = jax.block_until_ready(pose_encoder(x, params))
    ref = pose_encoder_ref(x, params)

    assert out.shape == (16, 32)
    assert jnp.allclose(out, ref, atol=1e-5, rtol=1e-5)

    print("KERNEL_OK")
</pallas_src>

<mosaic_0001>
module attributes {stable_mosaic.version = 11 : i64} {
  func.func @_pose_encoder_kernel(%arg0: i32, %arg1: memref<16x9xf32, #tpu.memory_space<vmem>>, %arg2: memref<96x32xf32, #tpu.memory_space<vmem>>, %arg3: memref<3x32xf32, #tpu.memory_space<vmem>>, %arg4: memref<16x32xf32, #tpu.memory_space<vmem>>) attributes {dimension_semantics = [#tpu.dimension_semantics<parallel>], iteration_bounds = array<i64: 1>, scalar_prefetch = 0 : i64, scratch_operands = 0 : i64, tpu.core_type = #tpu.core_type<tc>, window_params = [{transform_indices = @transform_0, window_bounds = array<i64: 16, 9>}, {pipeline_mode = #tpu.pipeline_mode<synchronous>, transform_indices = @transform_1, window_bounds = array<i64: 96, 32>}, {pipeline_mode = #tpu.pipeline_mode<synchronous>, transform_indices = @transform_2, window_bounds = array<i64: 3, 32>}, {transform_indices = @transform_3, window_bounds = array<i64: 16, 32>}]} {
    %c0 = arith.constant 0 : index
    %c0_0 = arith.constant 0 : index
    %0 = vector.load %arg1[%c0, %c0_0] : memref<16x9xf32, #tpu.memory_space<vmem>>, vector<16x9xf32>
    %c0_1 = arith.constant 0 : index
    %c0_2 = arith.constant 0 : index
    %1 = vector.load %arg2[%c0_1, %c0_2] : memref<96x32xf32, #tpu.memory_space<vmem>>, vector<9x32xf32>
    %c32 = arith.constant 32 : index
    %c0_3 = arith.constant 0 : index
    %2 = vector.load %arg2[%c32, %c0_3] : memref<96x32xf32, #tpu.memory_space<vmem>>, vector<32x32xf32>
    %c64 = arith.constant 64 : index
    %c0_4 = arith.constant 0 : index
    %3 = vector.load %arg2[%c64, %c0_4] : memref<96x32xf32, #tpu.memory_space<vmem>>, vector<32x32xf32>
    %cst = arith.constant dense<0.000000e+00> : vector<16x32xf32>
    %4 = tpu.matmul %0, %1, %cst {dimension_numbers = #tpu.dot_dimension_numbers<[1], [0], [0], [1], [0, 0, 1, 1], [], []>} : vector<16x9xf32>, vector<9x32xf32>, vector<16x32xf32> -> vector<16x32xf32>
    %c0_5 = arith.constant 0 : index
    %c0_6 = arith.constant 0 : index
    %5 = vector.load %arg3[%c0_5, %c0_6] : memref<3x32xf32, #tpu.memory_space<vmem>>, vector<1x32xf32>
    %6 = vector.broadcast %5 : vector<1x32xf32> to vector<16x32xf32>
    %7 = arith.addf %4, %6 : vector<16x32xf32>
    %cst_7 = arith.constant 0.000000e+00 : f32
    %8 = vector.broadcast %cst_7 : f32 to vector<16x32xf32>
    %9 = arith.maximumf %7, %8 : vector<16x32xf32>
    %cst_8 = arith.constant dense<0.000000e+00> : vector<16x32xf32>
    %10 = tpu.matmul %9, %2, %cst_8 {dimension_numbers = #tpu.dot_dimension_numbers<[1], [0], [0], [1], [0, 0, 1, 1], [], []>} : vector<16x32xf32>, vector<32x32xf32>, vector<16x32xf32> -> vector<16x32xf32>
    %c1 = arith.constant 1 : index
    %c0_9 = arith.constant 0 : index
    %11 = vector.load %arg3[%c1, %c0_9] : memref<3x32xf32, #tpu.memory_space<vmem>>, vector<1x32xf32>
    %12 = vector.broadcast %11 : vector<1x32xf32> to vector<16x32xf32>
    %13 = arith.addf %10, %12 : vector<16x32xf32>
    %cst_10 = arith.constant 0.000000e+00 : f32
    %14 = vector.broadcast %cst_10 : f32 to vector<16x32xf32>
    %15 = arith.maximumf %13, %14 : vector<16x32xf32>
    %cst_11 = arith.constant dense<0.000000e+00> : vector<16x32xf32>
    %16 = tpu.matmul %15, %3, %cst_11 {dimension_numbers = #tpu.dot_dimension_numbers<[1], [0], [0], [1], [0, 0, 1, 1], [], []>} : vector<16x32xf32>, vector<32x32xf32>, vector<16x32xf32> -> vector<16x32xf32>
    %c2 = arith.constant 2 : index
    %c0_12 = arith.constant 0 : index
    %17 = vector.load %arg3[%c2, %c0_12] : memref<3x32xf32, #tpu.memory_space<vmem>>, vector<1x32xf32>
    %18 = vector.broadcast %17 : vector<1x32xf32> to vector<16x32xf32>
    %19 = arith.addf %16, %18 : vector<16x32xf32>
    %cst_13 = arith.constant 0.000000e+00 : f32
    %20 = vector.broadcast %cst_13 : f32 to vector<16x32xf32>
    %21 = arith.maximumf %19, %20 : vector<16x32xf32>
    %c0_14 = arith.constant 0 : index
    %c0_15 = arith.constant 0 : index
    %22 = vector.load %arg4[%c0_14, %c0_15] : memref<16x32xf32, #tpu.memory_space<vmem>>, vector<16x32xf32>
    tpu.vector_store %arg4[%c0_14, %c0_15], %21 {strides = array<i32>} : memref<16x32xf32, #tpu.memory_space<vmem>>, vector<16x32xf32>,
    return
  }
  func.func @transform_0(%arg0: i32) -> (i32, i32) {
    %c0_i32 = arith.constant 0 : i32
    %c0_i32_0 = arith.constant 0 : i32
    return %arg0, %c0_i32 : i32, i32
  }
  func.func @transform_1(%arg0: i32) -> (i32, i32) {
    %c0_i32 = arith.constant 0 : i32
    %c0_i32_0 = arith.constant 0 : i32
    %c0_i32_1 = arith.constant 0 : i32
    return %c0_i32, %c0_i32_0 : i32, i32
  }
  func.func @transform_2(%arg0: i32) -> (i32, i32) {
    %c0_i32 = arith.constant 0 : i32
    %c0_i32_0 = arith.constant 0 : i32
    %c0_i32_1 = arith.constant 0 : i32
    return %c0_i32, %c0_i32_0 : i32, i32
  }
  func.func @transform_3(%arg0: i32) -> (i32, i32) {
    %c0_i32 = arith.constant 0 : i32
    %c0_i32_0 = arith.constant 0 : i32
    return %arg0, %c0_i32 : i32, i32
  }
}

</mosaic_0001>

<llo_original>
// kernel: tpu_custom_call.1
$region0: #{tpu_custom_call.1}
  #allocation0 [shape = 'u32[]', space=smem, size = 0x4, offset = 0x4, fixed_abs, tag = 'smem constant byte address 0x4 - core index']
  #allocation1 [shape = 'u32[72,128]{1,0:T(1,128)}', space=vmem, size = 0x9000, scoped, tag = 'internal scratch']
  %s0 = inlined_call_operand.vmem [shape: f32[16,9], index: 0, kind: input, shape index: {}]
  %s1 = inlined_call_operand.vmem [shape: f32[96,32], index: 1, kind: input, shape index: {}]
  %s2 = inlined_call_operand.vmem [shape: f32[3,32], index: 2, kind: input, shape index: {}]
  %s3 = inlined_call_operand.hbm [shape: f32[16,32], index: 3, kind: output, shape index: {}]
  %s4 = sld [smem:[#allocation0]]
  $region22: #{tpu_custom_call.1} parent=0
    _
  %s6 = ssub.s32 1, %s4
  %s7 = scalar_select 0, %s6, %s4
  $region1: #{tpu_custom_call.1} parent=0
    #allocation2 [shape = 'u8[8192]{0}', space=vmem, size = 0x2000, scoped, tag = 'output window, operand 0, single buffered']
    #allocation3 [shape = 's32[1]{0}', space=sflag, size = 0x4, scoped, tag = 'scoped memory for tpu_custom_call.1']
    %8 = vsyncpa [#allocation3], 0
    // Predicated region
    $region2: #{tpu_custom_call.1} parent=1 // pred_check
      _
    $region3: #{tpu_custom_call.1} parent=1 // pred_check_branch
      %10 = sbr.rel (0) target = $region5
    $region4: #{tpu_custom_call.1} parent=1 // pred_region
      _
    $region5: #{tpu_custom_call.1} parent=1 // pred_fallthru
      _
    // Predicated region
    $region6: #{tpu_custom_call.1} parent=1 // pred_check
      _
    $region7: #{tpu_custom_call.1} parent=1 // pred_check_branch
      %12 = sbr.rel (0) target = $region9
    $region8: #{tpu_custom_call.1} parent=1 // pred_region
      _
    $region9: #{tpu_custom_call.1} parent=1 // pred_fallthru
      _
    // Predicated region
    $region10: #{tpu_custom_call.1} parent=1 // pred_check
      _
    $region11: #{tpu_custom_call.1} parent=1 // pred_check_branch
      %14 = sbr.rel (0) target = $region13
    $region12: #{tpu_custom_call.1} parent=1 // pred_region
      _
    $region13: #{tpu_custom_call.1} parent=1 // pred_fallthru
      _
    %v15 = vld [vmem:[%s0] sm:$0xff]
    %v16 = vld [vmem:[%s0 + $0x8] sm:$0xff]
    %v17 = vld [vmem:[%s1] sm:$0xff]
    %v18 = vld [vmem:[%s1 + $0x8] sm:$0x1]
    %v19 = vld [vmem:[%s1 + $0x20] sm:$0xff]
    %v20 = vld [vmem:[%s1 + $0x28] sm:$0xff]
    %v21 = vld [vmem:[%s1 + $0x30] sm:$0xff]
    %v22 = vld [vmem:[%s1 + $0x38] sm:$0xff]
    %v23 = vld [vmem:[%s1 + $0x40] sm:$0xff]
    %v24 = vld [vmem:[%s1 + $0x48] sm:$0xff]
    %v25 = vld [vmem:[%s1 + $0x50] sm:$0xff]
    %v26 = vld [vmem:[%s1 + $0x58] sm:$0xff]
    %v27 = vld [vmem:[%s2] sm:$0x1]
    %v28 = vperm.slane %v27, 0
    %vm29 = vcmask 72704
    %v31 = vsel %vm29, %v15, 0
    %v34 = vsel %vm29, %v16, 0
    %vm36 = vcmask 1040384
    %v38 = vsel %vm36, %v18, 0
    %40 = vmatpush.msra.mxu0 0.0
    %41 = vmatpush.msra.mxu0 0.0
    %42 = vmatpush.msra.mxu0 0.0
    %43 = vmatpush.msra.mxu0 0.0
    %44 = vmatpush.msra.mxu0 0.0
    %45 = vmatpush.msra.mxu0 0.0
    %46 = vmatpush.msra.mxu0 0.0
    %47 = vmatpush.msra.mxu0 0.0
    %48 = vmatpush.msra.mxu0 0.0
    %49 = vmatpush.msra.mxu0 0.0
    %50 = vmatpush.msra.mxu0 0.0
    %51 = vmatpush.msra.mxu0 0.0
    %52 = vmatpush.msra.mxu0 0.0
    %53 = vmatpush.msra.mxu0 0.0
    %54 = vmatpush.msra.mxu0 %v38
    %55 = vmatpush.msra.mxu0 %v17
    %56 = vmatmul.f32.gmra.mxu0 %v31
    %v57 = vpop.f32.mrf.mxu0
    %v58 = vadd.f32 %v28, %v57
    %59 = vmatmul.f32.gmra.mxu0 %v34
    %v60 = vpop.f32.mrf.mxu0
    %v61 = vadd.f32 %v28, %v60
    %62 = vdwg.mxu0
    %v63 = vmax.f32 %v58, 0.0
    %v64 = vmax.f32 %v61, 0.0
    %v65 = vld [vmem:[%s2 + $0x1] sm:$0x1]
    %v66 = vperm.slane %v65, 0
    %vm67 = vcmask 261120
    %v69 = vsel %vm67, %v63, 0
    %v72 = vsel %vm67, %v64, 0
    %74 = vmatpush.msra.mxu0 0.0
    %75 = vmatpush.msra.mxu0 0.0
    %76 = vmatpush.msra.mxu0 0.0
    %77 = vmatpush.msra.mxu0 0.0
    %78 = vmatpush.msra.mxu0 0.0
    %79 = vmatpush.msra.mxu0 0.0
    %80 = vmatpush.msra.mxu0 0.0
    %81 = vmatpush.msra.mxu0 0.0
    %82 = vmatpush.msra.mxu0 0.0
    %83 = vmatpush.msra.mxu0 0.0
    %84 = vmatpush.msra.mxu0 0.0
    %85 = vmatpush.msra.mxu0 0.0
    %86 = vmatpush.msra.mxu0 %v22
    %87 = vmatpush.msra.mxu0 %v21
    %88 = vmatpush.msra.mxu0 %v20
    %89 = vmatpush.msra.mxu0 %v19
    %90 = vmatmul.f32.gmra.mxu0 %v69
    %v91 = vpop.f32.mrf.mxu0
    %v92 = vadd.f32 %v66, %v91
    %93 = vmatmul.f32.gmra.mxu0 %v72
    %v94 = vpop.f32.mrf.mxu0
    %v95 = vadd.f32 %v66, %v94
    %96 = vdwg.mxu0
    %v97 = vmax.f32 %v92, 0.0
    %v98 = vmax.f32 %v95, 0.0
    %v99 = vld [vmem:[%s2 + $0x2] sm:$0x1]
    %v100 = vperm.slane %v99, 0
    %v102 = vsel %vm67, %v97, 0
    %v105 = vsel %vm67, %v98, 0
    %107 = vmatpush.msra.mxu0 0.0
    %108 = vmatpush.msra.mxu0 0.0
    %109 = vmatpush.msra.mxu0 0.0
    %110 = vmatpush.msra.mxu0 0.0
    %111 = vmatpush.msra.mxu0 0.0
    %112 = vmatpush.msra.mxu0 0.0
    %113 = vmatpush.msra.mxu0 0.0
    %114 = vmatpush.msra.mxu0 0.0
    %115 = vmatpush.msra.mxu0 0.0
    %116 = vmatpush.msra.mxu0 0.0
    %117 = vmatpush.msra.mxu0 0.0
    %118 = vmatpush.msra.mxu0 0.0
    %119 = vmatpush.msra.mxu0 %v26
    %120 = vmatpush.msra.mxu0 %v25
    %121 = vmatpush.msra.mxu0 %v24
    %122 = vmatpush.msra.mxu0 %v23
    %123 = vmatmul.f32.gmra.mxu0 %v102
    %v124 = vpop.f32.mrf.mxu0
    %v125 = vadd.f32 %v100, %v124
    %126 = vmatmul.f32.gmra.mxu0 %v105
    %v127 = vpop.f32.mrf.mxu0
    %v128 = vadd.f32 %v100, %v127
    %129 = vdwg.mxu0
    %v130 = vmax.f32 %v125, 0.0
    %v131 = vmax.f32 %v128, 0.0
    %132 = vst.msk [vmem:[#allocation2] sm:$0xff] %vm67, %v130
    %133 = vst.msk [vmem:[#allocation2 + $0x8] sm:$0xff] %vm67, %v131
    // Predicated region
    $region14: #{tpu_custom_call.1} parent=1 // pred_check
      _
    $region15: #{tpu_custom_call.1} parent=1 // pred_check_branch
      %135 = sbr.rel (0) target = $region17
    $region16: #{tpu_custom_call.1} parent=1 // pred_region
      %137 = vsyncadd [#allocation3], 0
      %s138 = sshll.u32 [#allocation2], 4
      %s139 = int_to_ptr.vmem [resolvable:$true] %s138
      %s140 = sshll.u32 %s3, 4
      %s141 = int_to_ptr.hbm [resolvable:$true] %s140
      %146 = dma.vmem_to_hbm [thread:$0]  %s139, 256, %s141, [#allocation3], 128, 128, 8
    $region17: #{tpu_custom_call.1} parent=1 // pred_fallthru
      _
    // Predicated region
    $region18: #{tpu_custom_call.1} parent=1 // pred_check
      _
    $region19: #{tpu_custom_call.1} parent=1 // pred_check_branch
      %148 = sbr.rel (0) target = $region21
    $region20: #{tpu_custom_call.1} parent=1 // pred_region
      %150 = dma.done [#allocation3], 256
    $region21: #{tpu_custom_call.1} parent=1 // pred_fallthru
      _
    %151 = vsyncpa [#allocation3], 1

</llo_original>
